<compile_context>
chip_gen: v7x
topology: tpu7x:2x2x1
jax: 0.10.0
libtpu: 0.0.40
codegen_flags: <defaults>
</compile_context>

<pallas_src>
import jax
import jax.numpy as jnp
from jax.experimental import pallas as pl
from jax.experimental.pallas import tpu as pltpu

LANES = 128


def fusion_kernel(params_ref, seg_ref, bnd_ref, out_ref):
    # params_ref: SMEM (2 + 2C,) f32 = [alpha, bias, w_seg[0:C], w_bnd[0:C]]
    # seg_ref / bnd_ref / out_ref: VMEM (B, C, R, 128) — pixels on the
    # (sublane, lane) axes; channel dim is a cheap outer axis.
    C = seg_ref.shape[1]
    alpha = params_ref[0]
    bias = params_ref[1]

    # Pass 1: 1x1 conv over the concatenated channels == per-channel
    # scalar*vector FMAs, reading one (B,R,128) plane at a time straight from
    # VMEM (small live vreg set -> no spills at large tiles).  Two independent
    # accumulators halve the serial VPU dependency chain.
    acc_s = seg_ref[:, 0, :, :].astype(jnp.float32) * params_ref[2]
    acc_b = bnd_ref[:, 0, :, :].astype(jnp.float32) * params_ref[2 + C]
    for c in range(1, C):
        acc_s = acc_s + seg_ref[:, c, :, :].astype(jnp.float32) * params_ref[2 + c]
        acc_b = acc_b + bnd_ref[:, c, :, :].astype(jnp.float32) * params_ref[2 + C + c]

    att = jax.nn.sigmoid(acc_s + acc_b + bias)          # (B, R, 128), EUP
    seg_gate = alpha * att + (1.0 - alpha)
    bnd_gate = (1.0 - alpha) * att + alpha

    # Pass 2: per-channel gating, re-reading the channel planes from VMEM and
    # writing the matching lane-dense output plane (unmasked vst).
    for c in range(C):
        fused = (seg_ref[:, c, :, :].astype(jnp.float32) * seg_gate
                 + bnd_ref[:, c, :, :].astype(jnp.float32) * bnd_gate)
        out_ref[:, c, :, :] = fused.astype(out_ref.dtype)


def attention_fusion_balanced(seg, boundary_seg, conv_w, conv_b, alpha,
                              *, target_block_bytes=2 << 20):
    """seg, boundary_seg: (N, C, H, W).  conv_w: (1, 2C, 1, 1).  conv_b: (1,)."""
    N, C, H, W = seg.shape
    HW = H * W
    rows = pl.cdiv(HW, LANES)
    HW_pad = rows * LANES
    itemsize = jnp.dtype(seg.dtype).itemsize

    # Layout-preserving views; pad pixels to a multiple of 128 only if needed.
    seg_v = seg.reshape(N, C, HW)
    bnd_v = boundary_seg.reshape(N, C, HW)
    if HW_pad != HW:
        pad = ((0, 0), (0, 0), (0, HW_pad - HW))
        seg_v = jnp.pad(seg_v, pad)
        bnd_v = jnp.pad(bnd_v, pad)
    seg_v = seg_v.reshape(N, C, rows, LANES)
    bnd_v = bnd_v.reshape(N, C, rows, LANES)

    # SMEM scalars: [alpha, bias, w_seg[0:C], w_bnd[0:C]] (matches cat order).
    params = jnp.concatenate([
        jnp.asarray(alpha, jnp.float32).reshape(1),
        jnp.asarray(conv_b, jnp.float32).reshape(1),
        conv_w.reshape(2 * C).astype(jnp.float32),
    ])

    total_bytes = N * C * rows * LANES * itemsize
    fold_batch = total_bytes <= target_block_bytes

    if fold_batch:
        # Small problem: whole batch in one block, one grid step — the
        # ~0.35 us/step fixed cost isn't multiplied by N.
        R = rows
        grid = (1,)
        block = (N, C, R, LANES)
        index_map = lambda t: (0, 0, t, 0)
        semantics = ("parallel",)
        block_bytes = total_bytes
    else:
        # Per-sample row tiles sized to ~target_block_bytes per input block;
        # R a multiple of 8 (or full rows) so (R,128) tiles the vreg grid.
        per_row_bytes = C * LANES * itemsize
        r = max(int(target_block_bytes // per_row_bytes), 1)
        if r >= rows:
            R = rows
        else:
            R = min(max((r // 8) * 8, 8), rows)
        grid = (N, pl.cdiv(rows, R))
        block = (1, C, R, LANES)
        index_map = lambda n, t: (n, 0, t, 0)
        semantics = ("parallel", "parallel")
        block_bytes = C * R * LANES * itemsize

    # 3 arrays x 2 pipeline buffers x block (+ headroom); stay in the scoped
    # VMEM comfort zone of every generation (v5e 16 MiB, v6e/v7x 32 MiB).
    vmem_limit = int(min(max(8 * block_bytes, 16 << 20), 32 << 20))

    out = pl.pallas_call(
        fusion_kernel,
        out_shape=jax.ShapeDtypeStruct((N, C, rows, LANES), seg.dtype),
        grid=grid,
        in_specs=[
            pl.BlockSpec(memory_space=pltpu.SMEM),   # [alpha, bias, weights]
            pl.BlockSpec(block, index_map),          # seg tile
            pl.BlockSpec(block, index_map),          # boundary tile
        ],
        out_specs=pl.BlockSpec(block, index_map),
        compiler_params=pltpu.CompilerParams(
            dimension_semantics=semantics,
            vmem_limit_bytes=vmem_limit),
    )(params, seg_v, bnd_v)

    out = out.reshape(N, C, HW_pad)
    if HW_pad != HW:
        out = out[:, :, :HW]
    return out.reshape(N, C, H, W)


def reference(seg, boundary_seg, conv_w, conv_b, alpha):
    """Pure-JAX reference replicating the PyTorch forward exactly."""
    combined = jnp.concatenate([seg, boundary_seg], axis=1)          # (N, 2C, H, W)
    w = conv_w.reshape(1, -1)                                        # (1, 2C)
    logit = jnp.einsum('nchw,oc->nohw', combined, w) + conv_b.reshape(1, 1, 1, 1)
    att = jax.nn.sigmoid(logit)                                      # (N, 1, H, W)
    return seg * (alpha * att + (1 - alpha)) + boundary_seg * ((1 - alpha) * att + alpha)


if __name__ == "__main__":
    key = jax.random.PRNGKey(0)

    def make_case(k, N, C, H, W):
        k_seg, k_bnd, k_w, k_b = jax.random.split(k, 4)
        seg = jax.random.normal(k_seg, (N, C, H, W), dtype=jnp.float32)
        bnd = jax.random.normal(k_bnd, (N, C, H, W), dtype=jnp.float32)
        conv_w = jax.random.normal(k_w, (1, 2 * C, 1, 1), dtype=jnp.float32) * 0.1
        conv_b = jax.random.normal(k_b, (1,), dtype=jnp.float32) * 0.1
        alpha = jnp.float32(0.5)
        return seg, bnd, conv_w, conv_b, alpha

    k0, k1 = jax.random.split(key)

    # Case 1: nominal small shape -> single-block, batch-folded path.
    seg, bnd, conv_w, conv_b, alpha = make_case(k0, 2, 4, 16, 16)
    out = jax.block_until_ready(
        attention_fusion_balanced(seg, bnd, conv_w, conv_b, alpha))
    ref = reference(seg, bnd, conv_w, conv_b, alpha)
    assert out.shape == seg.shape
    assert jnp.allclose(out, ref, atol=1e-5, rtol=1e-5), "case 1 mismatch"

    # Case 2: non-multiple-of-128 spatial + tiny block budget to exercise the
    # padded, per-sample row-tiled path with a partial edge block.
    seg, bnd, conv_w, conv_b, alpha = make_case(k1, 2, 4, 47, 49)
    out = jax.block_until_ready(
        attention_fusion_balanced(seg, bnd, conv_w, conv_b, alpha,
                                  target_block_bytes=8 * 1024))
    ref = reference(seg, bnd, conv_w, conv_b, alpha)
    assert out.shape == seg.shape
    assert jnp.allclose(out, ref, atol=1e-5, rtol=1e-5), "case 2 mismatch"

    print("KERNEL_OK")
</pallas_src>

<mosaic_0001>
module attributes {stable_mosaic.version = 11 : i64} {
  func.func @fusion_kernel(%arg0: i32, %arg1: memref<10xf32, #tpu.memory_space<smem>>, %arg2: memref<2x4x2x128xf32, #tpu.memory_space<vmem>>, %arg3: memref<2x4x2x128xf32, #tpu.memory_space<vmem>>, %arg4: memref<2x4x2x128xf32, #tpu.memory_space<vmem>>) attributes {dimension_semantics = [#tpu.dimension_semantics<parallel>], iteration_bounds = array<i64: 1>, scalar_prefetch = 0 : i64, scratch_operands = 0 : i64, tpu.core_type = #tpu.core_type<tc>, window_params = [{transform_indices = @transform_0, window_bounds = array<i64: 10>}, {transform_indices = @transform_1, window_bounds = array<i64: 2, 4, 2, 128>}, {transform_indices = @transform_2, window_bounds = array<i64: 2, 4, 2, 128>}, {transform_indices = @transform_3, window_bounds = array<i64: 2, 4, 2, 128>}]} {
    %c0 = arith.constant 0 : index
    %0 = memref.load %arg1[%c0] : memref<10xf32, #tpu.memory_space<smem>>
    %c1 = arith.constant 1 : index
    %1 = memref.load %arg1[%c1] : memref<10xf32, #tpu.memory_space<smem>>
    %c0_0 = arith.constant 0 : index
    %c0_1 = arith.constant 0 : index
    %c0_2 = arith.constant 0 : index
    %c0_3 = arith.constant 0 : index
    %2 = vector.load %arg2[%c0_0, %c0_1, %c0_2, %c0_3] : memref<2x4x2x128xf32, #tpu.memory_space<vmem>>, vector<2x1x2x128xf32>
    %3 = vector.shape_cast %2 : vector<2x1x2x128xf32> to vector<2x2x128xf32>
    %c2 = arith.constant 2 : index
    %4 = memref.load %arg1[%c2] : memref<10xf32, #tpu.memory_space<smem>>
    %5 = vector.broadcast %4 : f32 to vector<2x2x128xf32>
    %6 = arith.mulf %3, %5 : vector<2x2x128xf32>
    %c0_4 = arith.constant 0 : index
    %c0_5 = arith.constant 0 : index
    %c0_6 = arith.constant 0 : index
    %c0_7 = arith.constant 0 : index
    %7 = vector.load %arg3[%c0_4, %c0_5, %c0_6, %c0_7] : memref<2x4x2x128xf32, #tpu.memory_space<vmem>>, vector<2x1x2x128xf32>
    %8 = vector.shape_cast %7 : vector<2x1x2x128xf32> to vector<2x2x128xf32>
    %c6 = arith.constant 6 : index
    %9 = memref.load %arg1[%c6] : memref<10xf32, #tpu.memory_space<smem>>
    %10 = vector.broadcast %9 : f32 to vector<2x2x128xf32>
    %11 = arith.mulf %8, %10 : vector<2x2x128xf32>
    %c0_8 = arith.constant 0 : index
    %c1_9 = arith.constant 1 : index
    %c0_10 = arith.constant 0 : index
    %c0_11 = arith.constant 0 : index
    %12 = vector.load %arg2[%c0_8, %c1_9, %c0_10, %c0_11] : memref<2x4x2x128xf32, #tpu.memory_space<vmem>>, vector<2x1x2x128xf32>
    %13 = vector.shape_cast %12 : vector<2x1x2x128xf32> to vector<2x2x128xf32>
    %c3 = arith.constant 3 : index
    %14 = memref.load %arg1[%c3] : memref<10xf32, #tpu.memory_space<smem>>
    %15 = vector.broadcast %14 : f32 to vector<2x2x128xf32>
    %16 = arith.mulf %13, %15 : vector<2x2x128xf32>
    %17 = arith.addf %6, %16 : vector<2x2x128xf32>
    %c0_12 = arith.constant 0 : index
    %c1_13 = arith.constant 1 : index
    %c0_14 = arith.constant 0 : index
    %c0_15 = arith.constant 0 : index
    %18 = vector.load %arg3[%c0_12, %c1_13, %c0_14, %c0_15] : memref<2x4x2x128xf32, #tpu.memory_space<vmem>>, vector<2x1x2x128xf32>
    %19 = vector.shape_cast %18 : vector<2x1x2x128xf32> to vector<2x2x128xf32>
    %c7 = arith.constant 7 : index
    %20 = memref.load %arg1[%c7] : memref<10xf32, #tpu.memory_space<smem>>
    %21 = vector.broadcast %20 : f32 to vector<2x2x128xf32>
    %22 = arith.mulf %19, %21 : vector<2x2x128xf32>
    %23 = arith.addf %11, %22 : vector<2x2x128xf32>
    %c0_16 = arith.constant 0 : index
    %c2_17 = arith.constant 2 : index
    %c0_18 = arith.constant 0 : index
    %c0_19 = arith.constant 0 : index
    %24 = vector.load %arg2[%c0_16, %c2_17, %c0_18, %c0_19] : memref<2x4x2x128xf32, #tpu.memory_space<vmem>>, vector<2x1x2x128xf32>
    %25 = vector.shape_cast %24 : vector<2x1x2x128xf32> to vector<2x2x128xf32>
    %c4 = arith.constant 4 : index
    %26 = memref.load %arg1[%c4] : memref<10xf32, #tpu.memory_space<smem>>
    %27 = vector.broadcast %26 : f32 to vector<2x2x128xf32>
    %28 = arith.mulf %25, %27 : vector<2x2x128xf32>
    %29 = arith.addf %17, %28 : vector<2x2x128xf32>
    %c0_20 = arith.constant 0 : index
    %c2_21 = arith.constant 2 : index
    %c0_22 = arith.constant 0 : index
    %c0_23 = arith.constant 0 : index
    %30 = vector.load %arg3[%c0_20, %c2_21, %c0_22, %c0_23] : memref<2x4x2x128xf32, #tpu.memory_space<vmem>>, vector<2x1x2x128xf32>
    %31 = vector.shape_cast %30 : vector<2x1x2x128xf32> to vector<2x2x128xf32>
    %c8 = arith.constant 8 : index
    %32 = memref.load %arg1[%c8] : memref<10xf32, #tpu.memory_space<smem>>
    %33 = vector.broadcast %32 : f32 to vector<2x2x128xf32>
    %34 = arith.mulf %31, %33 : vector<2x2x128xf32>
    %35 = arith.addf %23, %34 : vector<2x2x128xf32>
    %c0_24 = arith.constant 0 : index
    %c3_25 = arith.constant 3 : index
    %c0_26 = arith.constant 0 : index
    %c0_27 = arith.constant 0 : index
    %36 = vector.load %arg2[%c0_24, %c3_25, %c0_26, %c0_27] : memref<2x4x2x128xf32, #tpu.memory_space<vmem>>, vector<2x1x2x128xf32>
    %37 = vector.shape_cast %36 : vector<2x1x2x128xf32> to vector<2x2x128xf32>
    %c5 = arith.constant 5 : index
    %38 = memref.load %arg1[%c5] : memref<10xf32, #tpu.memory_space<smem>>
    %39 = vector.broadcast %38 : f32 to vector<2x2x128xf32>
    %40 = arith.mulf %37, %39 : vector<2x2x128xf32>
    %41 = arith.addf %29, %40 : vector<2x2x128xf32>
    %c0_28 = arith.constant 0 : index
    %c3_29 = arith.constant 3 : index
    %c0_30 = arith.constant 0 : index
    %c0_31 = arith.constant 0 : index
    %42 = vector.load %arg3[%c0_28, %c3_29, %c0_30, %c0_31] : memref<2x4x2x128xf32, #tpu.memory_space<vmem>>, vector<2x1x2x128xf32>
    %43 = vector.shape_cast %42 : vector<2x1x2x128xf32> to vector<2x2x128xf32>
    %c9 = arith.constant 9 : index
    %44 = memref.load %arg1[%c9] : memref<10xf32, #tpu.memory_space<smem>>
    %45 = vector.broadcast %44 : f32 to vector<2x2x128xf32>
    %46 = arith.mulf %43, %45 : vector<2x2x128xf32>
    %47 = arith.addf %35, %46 : vector<2x2x128xf32>
    %48 = arith.addf %41, %47 : vector<2x2x128xf32>
    %49 = vector.broadcast %1 : f32 to vector<2x2x128xf32>
    %50 = arith.addf %48, %49 : vector<2x2x128xf32>
    %51 = arith.negf %50 : vector<2x2x128xf32>
    %52 = math.exp %51 : vector<2x2x128xf32>
    %cst = arith.constant 1.000000e+00 : f32
    %53 = vector.broadcast %cst : f32 to vector<2x2x128xf32>
    %54 = arith.addf %53, %52 : vector<2x2x128xf32>
    %55 = arith.divf %53, %54 : vector<2x2x128xf32>
    %56 = vector.broadcast %0 : f32 to vector<2x2x128xf32>
    %57 = arith.mulf %56, %55 : vector<2x2x128xf32>
    %cst_32 = arith.constant 1.000000e+00 : f32
    %58 = arith.subf %cst_32, %0 : f32
    %59 = vector.broadcast %58 : f32 to vector<2x2x128xf32>
    %60 = arith.addf %57, %59 : vector<2x2x128xf32>
    %cst_33 = arith.constant 1.000000e+00 : f32
    %61 = arith.subf %cst_33, %0 : f32
    %62 = vector.broadcast %61 : f32 to vector<2x2x128xf32>
    %63 = arith.mulf %62, %55 : vector<2x2x128xf32>
    %64 = vector.broadcast %0 : f32 to vector<2x2x128xf32>
    %65 = arith.addf %63, %64 : vector<2x2x128xf32>
    %c0_34 = arith.constant 0 : index
    %c0_35 = arith.constant 0 : index
    %c0_36 = arith.constant 0 : index
    %c0_37 = arith.constant 0 : index
    %66 = vector.load %arg2[%c0_34, %c0_35, %c0_36, %c0_37] : memref<2x4x2x128xf32, #tpu.memory_space<vmem>>, vector<2x1x2x128xf32>
    %67 = vector.shape_cast %66 : vector<2x1x2x128xf32> to vector<2x2x128xf32>
    %68 = arith.mulf %67, %60 : vector<2x2x128xf32>
    %c0_38 = arith.constant 0 : index
    %c0_39 = arith.constant 0 : index
    %c0_40 = arith.constant 0 : index
    %c0_41 = arith.constant 0 : index
    %69 = vector.load %arg3[%c0_38, %c0_39, %c0_40, %c0_41] : memref<2x4x2x128xf32, #tpu.memory_space<vmem>>, vector<2x1x2x128xf32>
    %70 = vector.shape_cast %69 : vector<2x1x2x128xf32> to vector<2x2x128xf32>
    %71 = arith.mulf %70, %65 : vector<2x2x128xf32>
    %72 = arith.addf %68, %71 : vector<2x2x128xf32>
    %c0_42 = arith.constant 0 : index
    %c0_43 = arith.constant 0 : index
    %c0_44 = arith.constant 0 : index
    %c0_45 = arith.constant 0 : index
    %73 = vector.load %arg4[%c0_42, %c0_43, %c0_44, %c0_45] : memref<2x4x2x128xf32, #tpu.memory_space<vmem>>, vector<2x1x2x128xf32>
    %74 = vector.shape_cast %73 : vector<2x1x2x128xf32> to vector<2x2x128xf32>
    %75 = vector.shape_cast %72 : vector<2x2x128xf32> to vector<2x1x2x128xf32>
    tpu.vector_store %arg4[%c0_42, %c0_43, %c0_44, %c0_45], %75 {strides = array<i32>} : memref<2x4x2x128xf32, #tpu.memory_space<vmem>>, vector<2x1x2x128xf32>,
    %c0_46 = arith.constant 0 : index
    %c1_47 = arith.constant 1 : index
    %c0_48 = arith.constant 0 : index
    %c0_49 = arith.constant 0 : index
    %76 = vector.load %arg2[%c0_46, %c1_47, %c0_48, %c0_49] : memref<2x4x2x128xf32, #tpu.memory_space<vmem>>, vector<2x1x2x128xf32>
    %77 = vector.shape_cast %76 : vector<2x1x2x128xf32> to vector<2x2x128xf32>
    %78 = arith.mulf %77, %60 : vector<2x2x128xf32>
    %c0_50 = arith.constant 0 : index
    %c1_51 = arith.constant 1 : index
    %c0_52 = arith.constant 0 : index
    %c0_53 = arith.constant 0 : index
    %79 = vector.load %arg3[%c0_50, %c1_51, %c0_52, %c0_53] : memref<2x4x2x128xf32, #tpu.memory_space<vmem>>, vector<2x1x2x128xf32>
    %80 = vector.shape_cast %79 : vector<2x1x2x128xf32> to vector<2x2x128xf32>
    %81 = arith.mulf %80, %65 : vector<2x2x128xf32>
    %82 = arith.addf %78, %81 : vector<2x2x128xf32>
    %c0_54 = arith.constant 0 : index
    %c1_55 = arith.constant 1 : index
    %c0_56 = arith.constant 0 : index
    %c0_57 = arith.constant 0 : index
    %83 = vector.load %arg4[%c0_54, %c1_55, %c0_56, %c0_57] : memref<2x4x2x128xf32, #tpu.memory_space<vmem>>, vector<2x1x2x128xf32>
    %84 = vector.shape_cast %83 : vector<2x1x2x128xf32> to vector<2x2x128xf32>
    %85 = vector.shape_cast %82 : vector<2x2x128xf32> to vector<2x1x2x128xf32>
    tpu.vector_store %arg4[%c0_54, %c1_55, %c0_56, %c0_57], %85 {strides = array<i32>} : memref<2x4x2x128xf32, #tpu.memory_space<vmem>>, vector<2x1x2x128xf32>,
    %c0_58 = arith.constant 0 : index
    %c2_59 = arith.constant 2 : index
    %c0_60 = arith.constant 0 : index
    %c0_61 = arith.constant 0 : index
    %86 = vector.load %arg2[%c0_58, %c2_59, %c0_60, %c0_61] : memref<2x4x2x128xf32, #tpu.memory_space<vmem>>, vector<2x1x2x128xf32>
    %87 = vector.shape_cast %86 : vector<2x1x2x128xf32> to vector<2x2x128xf32>
    %88 = arith.mulf %87, %60 : vector<2x2x128xf32>
    %c0_62 = arith.constant 0 : index
    %c2_63 = arith.constant 2 : index
    %c0_64 = arith.constant 0 : index
    %c0_65 = arith.constant 0 : index
    %89 = vector.load %arg3[%c0_62, %c2_63, %c0_64, %c0_65] : memref<2x4x2x128xf32, #tpu.memory_space<vmem>>, vector<2x1x2x128xf32>
    %90 = vector.shape_cast %89 : vector<2x1x2x128xf32> to vector<2x2x128xf32>
    %91 = arith.mulf %90, %65 : vector<2x2x128xf32>
    %92 = arith.addf %88, %91 : vector<2x2x128xf32>
    %c0_66 = arith.constant 0 : index
    %c2_67 = arith.constant 2 : index
    %c0_68 = arith.constant 0 : index
    %c0_69 = arith.constant 0 : index
    %93 = vector.load %arg4[%c0_66, %c2_67, %c0_68, %c0_69] : memref<2x4x2x128xf32, #tpu.memory_space<vmem>>, vector<2x1x2x128xf32>
    %94 = vector.shape_cast %93 : vector<2x1x2x128xf32> to vector<2x2x128xf32>
    %95 = vector.shape_cast %92 : vector<2x2x128xf32> to vector<2x1x2x128xf32>
    tpu.vector_store %arg4[%c0_66, %c2_67, %c0_68, %c0_69], %95 {strides = array<i32>} : memref<2x4x2x128xf32, #tpu.memory_space<vmem>>, vector<2x1x2x128xf32>,
    %c0_70 = arith.constant 0 : index
    %c3_71 = arith.constant 3 : index
    %c0_72 = arith.constant 0 : index
    %c0_73 = arith.constant 0 : index
    %96 = vector.load %arg2[%c0_70, %c3_71, %c0_72, %c0_73] : memref<2x4x2x128xf32, #tpu.memory_space<vmem>>, vector<2x1x2x128xf32>
    %97 = vector.shape_cast %96 : vector<2x1x2x128xf32> to vector<2x2x128xf32>
    %98 = arith.mulf %97, %60 : vector<2x2x128xf32>
    %c0_74 = arith.constant 0 : index
    %c3_75 = arith.constant 3 : index
    %c0_76 = arith.constant 0 : index
    %c0_77 = arith.constant 0 : index
    %99 = vector.load %arg3[%c0_74, %c3_75, %c0_76, %c0_77] : memref<2x4x2x128xf32, #tpu.memory_space<vmem>>, vector<2x1x2x128xf32>
    %100 = vector.shape_cast %99 : vector<2x1x2x128xf32> to vector<2x2x128xf32>
    %101 = arith.mulf %100, %65 : vector<2x2x128xf32>
    %102 = arith.addf %98, %101 : vector<2x2x128xf32>
    %c0_78 = arith.constant 0 : index
    %c3_79 = arith.constant 3 : index
    %c0_80 = arith.constant 0 : index
    %c0_81 = arith.constant 0 : index
    %103 = vector.load %arg4[%c0_78, %c3_79, %c0_80, %c0_81] : memref<2x4x2x128xf32, #tpu.memory_space<vmem>>, vector<2x1x2x128xf32>
    %104 = vector.shape_cast %103 : vector<2x1x2x128xf32> to vector<2x2x128xf32>
    %105 = vector.shape_cast %102 : vector<2x2x128xf32> to vector<2x1x2x128xf32>
    tpu.vector_store %arg4[%c0_78, %c3_79, %c0_80, %c0_81], %105 {strides = array<i32>} : memref<2x4x2x128xf32, #tpu.memory_space<vmem>>, vector<2x1x2x128xf32>,
    return
  }
  func.func @transform_0(%arg0: i32) -> i32 {
    %c0_i32 = arith.constant 0 : i32
    %c0_i32_0 = arith.constant 0 : i32
    return %c0_i32 : i32
  }
  func.func @transform_1(%arg0: i32) -> (i32, i32, i32, i32) {
    %c0_i32 = arith.constant 0 : i32
    %c0_i32_0 = arith.constant 0 : i32
    %c0_i32_1 = arith.constant 0 : i32
    %c0_i32_2 = arith.constant 0 : i32
    return %c0_i32, %c0_i32_0, %arg0, %c0_i32_1 : i32, i32, i32, i32
  }
  func.func @transform_2(%arg0: i32) -> (i32, i32, i32, i32) {
    %c0_i32 = arith.constant 0 : i32
    %c0_i32_0 = arith.constant 0 : i32
    %c0_i32_1 = arith.constant 0 : i32
    %c0_i32_2 = arith.constant 0 : i32
    return %c0_i32, %c0_i32_0, %arg0, %c0_i32_1 : i32, i32, i32, i32
  }
  func.func @transform_3(%arg0: i32) -> (i32, i32, i32, i32) {
    %c0_i32 = arith.constant 0 : i32
    %c0_i32_0 = arith.constant 0 : i32
    %c0_i32_1 = arith.constant 0 : i32
    %c0_i32_2 = arith.constant 0 : i32
    return %c0_i32, %c0_i32_0, %arg0, %c0_i32_1 : i32, i32, i32, i32
  }
}

</mosaic_0001>

<llo_original>
// kernel: tpu_custom_call.1
$region0: #{tpu_custom_call.1}
  #allocation0 [shape = 'u32[]', space=smem, size = 0x4, offset = 0x4, fixed_abs, tag = 'smem constant byte address 0x4 - core index']
  #allocation1 [shape = 'u32[144,128]{1,0:T(1,128)}', space=vmem, size = 0x12000, scoped, tag = 'internal scratch']
  %s0 = inlined_call_operand.hbm [shape: f32[10], index: 0, kind: input, shape index: {}]
  %s1 = inlined_call_operand.hbm [shape: f32[2,4,2,128], index: 1, kind: input, shape index: {}]
  %s2 = inlined_call_operand.hbm [shape: f32[2,4,2,128], index: 2, kind: input, shape index: {}]
  %s3 = inlined_call_operand.hbm [shape: f32[2,4,2,128], index: 3, kind: output, shape index: {}]
  %s4 = sld [smem:[#allocation0]]
  $region34: #{tpu_custom_call.1} parent=0
    _
  %s6 = ssub.s32 1, %s4
  %s7 = scalar_select 0, %s6, %s4
  $region1: #{tpu_custom_call.1} parent=0
    #allocation2 [shape = 'u8[512]{0}', space=smem, size = 0x200, scoped, tag = 'input window, operand 0, single buffered']
    #allocation3 [shape = 's32[1]{0}', space=sflag, size = 0x4, scoped, tag = 'scoped memory for tpu_custom_call.1']
    #allocation4 [shape = 's32[1]{0}', space=sflag, size = 0x4, scoped, tag = 'scoped memory for tpu_custom_call.1']
    #allocation5 [shape = 's32[1]{0}', space=sflag, size = 0x4, scoped, tag = 'scoped memory for tpu_custom_call.1']
    #allocation6 [shape = 'u8[8192]{0}', space=vmem, size = 0x2000, scoped, tag = 'input window, operand 1, single buffered']
    #allocation7 [shape = 'u8[8192]{0}', space=vmem, size = 0x2000, scoped, tag = 'input window, operand 2, single buffered']
    #allocation8 [shape = 's32[1]{0}', space=sflag, size = 0x4, scoped, tag = 'scoped memory for tpu_custom_call.1']
    #allocation9 [shape = 'u8[8192]{0}', space=vmem, size = 0x2000, scoped, tag = 'output window, operand 0, single buffered']
    %8 = vsyncpa [#allocation5], 0
    %9 = vsyncpa [#allocation3], 0
    %10 = vsyncpa [#allocation8], 0
    %11 = vsyncpa [#allocation4], 0
    // Predicated region
    $region2: #{tpu_custom_call.1} parent=1 // pred_check
      _
    $region3: #{tpu_custom_call.1} parent=1 // pred_check_branch
      %13 = sbr.rel (0) target = $region5
    $region4: #{tpu_custom_call.1} parent=1 // pred_region
      %s15 = ssub.s32 16, 16
      %16 = vsyncadd [#allocation5], %s15
      %19 = dma.hbm_to_smem %s0, 16, [#allocation2], [#allocation5]
    $region5: #{tpu_custom_call.1} parent=1 // pred_fallthru
      _
    // Predicated region
    $region6: #{tpu_custom_call.1} parent=1 // pred_check
      _
    $region7: #{tpu_custom_call.1} parent=1 // pred_check_branch
      %21 = sbr.rel (0) target = $region9
    $region8: #{tpu_custom_call.1} parent=1 // pred_region
      %s23 = ssub.s32 256, 256
      %24 = vsyncadd [#allocation3], %s23
      %s25 = sshll.u32 [#allocation6], 4
      %s26 = int_to_ptr.vmem [resolvable:$true] %s25
      %31 = dma.hbm_to_vmem [thread:$0]  %s1, 256, %s26, [#allocation3], 32, 32, 2
    $region9: #{tpu_custom_call.1} parent=1 // pred_fallthru
      _
    // Predicated region
    $region10: #{tpu_custom_call.1} parent=1 // pred_check
      _
    $region11: #{tpu_custom_call.1} parent=1 // pred_check_branch
      %33 = sbr.rel (0) target = $region13
    $region12: #{tpu_custom_call.1} parent=1 // pred_region
      %s35 = ssub.s32 256, 256
      %36 = vsyncadd [#allocation8], %s35
      %s37 = sshll.u32 [#allocation7], 4
      %s38 = int_to_ptr.vmem [resolvable:$true] %s37
      %43 = dma.hbm_to_vmem [thread:$0]  %s2, 256, %s38, [#allocation8], 32, 32, 2
    $region13: #{tpu_custom_call.1} parent=1 // pred_fallthru
      _
    // Predicated region
    $region14: #{tpu_custom_call.1} parent=1 // pred_check
      _
    $region15: #{tpu_custom_call.1} parent=1 // pred_check_branch
      %45 = sbr.rel (0) target = $region17
    $region16: #{tpu_custom_call.1} parent=1 // pred_region
      %46 = dma.done [#allocation5], 16
    $region17: #{tpu_custom_call.1} parent=1 // pred_fallthru
      _
    // Predicated region
    $region18: #{tpu_custom_call.1} parent=1 // pred_check
      _
    $region19: #{tpu_custom_call.1} parent=1 // pred_check_branch
      %48 = sbr.rel (0) target = $region21
    $region20: #{tpu_custom_call.1} parent=1 // pred_region
      %49 = dma.done [#allocation3], 256
    $region21: #{tpu_custom_call.1} parent=1 // pred_fallthru
      _
    // Predicated region
    $region22: #{tpu_custom_call.1} parent=1 // pred_check
      _
    $region23: #{tpu_custom_call.1} parent=1 // pred_check_branch
      %51 = sbr.rel (0) target = $region25
    $region24: #{tpu_custom_call.1} parent=1 // pred_region
      %52 = dma.done [#allocation8], 256
    $region25: #{tpu_custom_call.1} parent=1 // pred_fallthru
      _
    %53 = sfence
    %s54 = sld [smem:[#allocation2]]
    %s55 = sld [smem:[#allocation2 + $0x1]]
    %v56 = vld [vmem:[#allocation6] sm:$0x3]
    %v57 = vld [vmem:[#allocation6 + $0x8] sm:$0x3]
    %s58 = sld [smem:[#allocation2 + $0x2]]
    %v59 = vstv %s58
    %v60 = vmul.f32 %v56, %v59
    %v61 = vmul.f32 %v57, %v59
    %v62 = vld [vmem:[#allocation7] sm:$0x3]
    %v63 = vld [vmem:[#allocation7 + $0x8] sm:$0x3]
    %s64 = sld [smem:[#allocation2 + $0x6]]
    %v65 = vstv %s64
    %v66 = vmul.f32 %v62, %v65
    %v67 = vmul.f32 %v63, %v65
    %s68 = scalar_lea.vmem [#allocation6], 2
    %v69 = vld [vmem:[%s68] sm:$0x3]
    %v70 = vld [vmem:[%s68 + $0x8] sm:$0x3]
    %s71 = sld [smem:[#allocation2 + $0x3]]
    %v72 = vstv %s71
    %v73 = vmul.f32 %v69, %v72
    %v74 = vmul.f32 %v70, %v72
    %v75 = vadd.f32 %v60, %v73
    %v76 = vadd.f32 %v61, %v74
    %s77 = scalar_lea.vmem [#allocation7], 2
    %v78 = vld [vmem:[%s77] sm:$0x3]
    %v79 = vld [vmem:[%s77 + $0x8] sm:$0x3]
    %s80 = sld [smem:[#allocation2 + $0x7]]
    %v81 = vstv %s80
    %v82 = vmul.f32 %v78, %v81
    %v83 = vmul.f32 %v79, %v81
    %v84 = vadd.f32 %v66, %v82
    %v85 = vadd.f32 %v67, %v83
    %s86 = scalar_lea.vmem [#allocation6], 4
    %v87 = vld [vmem:[%s86] sm:$0x3]
    %v88 = vld [vmem:[%s86 + $0x8] sm:$0x3]
    %s89 = sld [smem:[#allocation2 + $0x4]]
    %v90 = vstv %s89
    %v91 = vmul.f32 %v87, %v90
    %v92 = vmul.f32 %v88, %v90
    %v93 = vadd.f32 %v75, %v91
    %v94 = vadd.f32 %v76, %v92
    %s95 = scalar_lea.vmem [#allocation7], 4
    %v96 = vld [vmem:[%s95] sm:$0x3]
    %v97 = vld [vmem:[%s95 + $0x8] sm:$0x3]
    %s98 = sld [smem:[#allocation2 + $0x8]]
    %v99 = vstv %s98
    %v100 = vmul.f32 %v96, %v99
    %v101 = vmul.f32 %v97, %v99
    %v102 = vadd.f32 %v84, %v100
    %v103 = vadd.f32 %v85, %v101
    %s104 = scalar_lea.vmem [#allocation6], 6
    %v105 = vld [vmem:[%s104] sm:$0x3]
    %v106 = vld [vmem:[%s104 + $0x8] sm:$0x3]
    %s107 = sld [smem:[#allocation2 + $0x5]]
    %v108 = vstv %s107
    %v109 = vmul.f32 %v105, %v108
    %v110 = vmul.f32 %v106, %v108
    %v111 = vadd.f32 %v93, %v109
    %v112 = vadd.f32 %v94, %v110
    %s113 = scalar_lea.vmem [#allocation7], 6
    %v114 = vld [vmem:[%s113] sm:$0x3]
    %v115 = vld [vmem:[%s113 + $0x8] sm:$0x3]
    %s116 = sld [smem:[#allocation2 + $0x9]]
    %v117 = vstv %s116
    %v118 = vmul.f32 %v114, %v117
    %v119 = vmul.f32 %v115, %v117
    %v120 = vadd.f32 %v102, %v118
    %v121 = vadd.f32 %v103, %v119
    %v122 = vadd.f32 %v111, %v120
    %v123 = vadd.f32 %v112, %v121
    %v124 = vstv %s55
    %v125 = vadd.f32 %v122, %v124
    %v126 = vadd.f32 %v123, %v124
    %v127 = vxor.u32 %v125, 2147483648
    %v128 = vxor.u32 %v126, 2147483648
    %v129 = vmul.f32 %v127, 1.442695
    %v130 = vpow.pop %v129
    %v131 = vmul.f32 %v128, 1.442695
    %v132 = vpow.pop %v131
    %v133 = vadd.f32 %v130, 1.0
    %v134 = vadd.f32 %v132, 1.0
    %v135 = vrcp.pop %v133
    %v136 = vmul.f32 1.0, %v135
    %v137 = vrcp.pop %v134
    %v138 = vmul.f32 1.0, %v137
    %v139 = vstv %s54
    %v140 = vmul.f32 %v139, %v136
    %v141 = vmul.f32 %v139, %v138
    %s142 = ssub.f32 1.0, %s54
    %v143 = vstv %s142
    %v144 = vadd.f32 %v140, %v143
    %v145 = vadd.f32 %v141, %v143
    %v146 = vmul.f32 %v143, %v136
    %v147 = vmul.f32 %v143, %v138
    %v148 = vadd.f32 %v146, %v139
    %v149 = vadd.f32 %v147, %v139
    %v150 = vmul.f32 %v56, %v144
    %v151 = vmul.f32 %v57, %v145
    %v152 = vmul.f32 %v62, %v148
    %v153 = vmul.f32 %v63, %v149
    %v154 = vadd.f32 %v150, %v152
    %v155 = vadd.f32 %v151, %v153
    %156 = vst [vmem:[#allocation9] sm:$0x3] %v154
    %157 = vst [vmem:[#allocation9 + $0x8] sm:$0x3] %v155
    %v158 = vld [vmem:[%s68] sm:$0x3]
    %v159 = vld [vmem:[%s68 + $0x8] sm:$0x3]
    %v160 = vmul.f32 %v158, %v144
    %v161 = vmul.f32 %v159, %v145
    %v162 = vld [vmem:[%s77] sm:$0x3]
    %v163 = vld [vmem:[%s77 + $0x8] sm:$0x3]
    %v164 = vmul.f32 %v162, %v148
    %v165 = vmul.f32 %v163, %v149
    %v166 = vadd.f32 %v160, %v164
    %v167 = vadd.f32 %v161, %v165
    %s168 = scalar_lea.vmem [#allocation9], 2
    %169 = vst [vmem:[%s168] sm:$0x3] %v166
    %170 = vst [vmem:[%s168 + $0x8] sm:$0x3] %v167
    %v171 = vld [vmem:[%s86] sm:$0x3]
    %v172 = vld [vmem:[%s86 + $0x8] sm:$0x3]
    %v173 = vmul.f32 %v171, %v144
    %v174 = vmul.f32 %v172, %v145
    %v175 = vld [vmem:[%s95] sm:$0x3]
    %v176 = vld [vmem:[%s95 + $0x8] sm:$0x3]
    %v177 = vmul.f32 %v175, %v148
    %v178 = vmul.f32 %v176, %v149
    %v179 = vadd.f32 %v173, %v177
    %v180 = vadd.f32 %v174, %v178
    %s181 = scalar_lea.vmem [#allocation9], 4
    %182 = vst [vmem:[%s181] sm:$0x3] %v179
    %183 = vst [vmem:[%s181 + $0x8] sm:$0x3] %v180
    %v184 = vld [vmem:[%s104] sm:$0x3]
    %v185 = vld [vmem:[%s104 + $0x8] sm:$0x3]
    %v186 = vmul.f32 %v184, %v144
    %v187 = vmul.f32 %v185, %v145
    %v188 = vld [vmem:[%s113] sm:$0x3]
    %v189 = vld [vmem:[%s113 + $0x8] sm:$0x3]
    %v190 = vmul.f32 %v188, %v148
    %v191 = vmul.f32 %v189, %v149
    %v192 = vadd.f32 %v186, %v190
    %v193 = vadd.f32 %v187, %v191
    %s194 = scalar_lea.vmem [#allocation9], 6
    %195 = vst [vmem:[%s194] sm:$0x3] %v192
    %196 = vst [vmem:[%s194 + $0x8] sm:$0x3] %v193
    // Predicated region
    $region26: #{tpu_custom_call.1} parent=1 // pred_check
      _
    $region27: #{tpu_custom_call.1} parent=1 // pred_check_branch
      %198 = sbr.rel (0) target = $region29
    $region28: #{tpu_custom_call.1} parent=1 // pred_region
      %s200 = ssub.s32 256, 256
      %201 = vsyncadd [#allocation4], %s200
      %s202 = sshll.u32 [#allocation9], 4
      %s203 = int_to_ptr.vmem [resolvable:$true] %s202
      %208 = dma.vmem_to_hbm [thread:$0]  %s203, 256, %s3, [#allocation4], 32, 32, 2
    $region29: #{tpu_custom_call.1} parent=1 // pred_fallthru
      _
    // Predicated region
    $region30: #{tpu_custom_call.1} parent=1 // pred_check
      _
    $region31: #{tpu_custom_call.1} parent=1 // pred_check_branch
      %210 = sbr.rel (0) target = $region33
    $region32: #{tpu_custom_call.1} parent=1 // pred_region
      %211 = dma.done [#allocation4], 256
    $region33: #{tpu_custom_call.1} parent=1 // pred_fallthru
      _
    %212 = vsyncpa [#allocation3], 1
    %213 = vsyncpa [#allocation8], 1
    %214 = vsyncpa [#allocation4], 1
    %215 = vsyncpa [#allocation5], 1

</llo_original>
